<compile_context>
chip_gen: v6e
topology: v6e:2x2x1
jax: 0.10.0
libtpu: 0.0.40
codegen_flags: <defaults>
</compile_context>

<pallas_src>
import numpy as np
import jax
import jax.numpy as jnp
from jax.experimental import pallas as pl
from jax.experimental.pallas import tpu as pltpu


def _round_up(x, m):
    return (x + m - 1) // m * m


def _build_masks(h, w):
    """Border-validity masks for the 9 taps of a 3x3 'same' conv -> (9, h*w) f32."""
    pos = np.arange(h * w)
    row, col = pos // w, pos % w
    masks = np.empty((9, h * w), np.float32)
    idx = 0
    for dy in (-1, 0, 1):
        for dx in (-1, 0, 1):
            valid = (row + dy >= 0) & (row + dy < h) & (col + dx >= 0) & (col + dx < w)
            masks[idx] = valid.astype(np.float32)
            idx += 1
    return masks


def _pack_weights(w_hwio, cin_pad):
    """(3,3,ci,co) -> (co, 9*cin_pad) bf16, tap-major rows matching the kernel's im2col."""
    co, ci = w_hwio.shape[3], w_hwio.shape[2]
    wt = jnp.transpose(w_hwio, (3, 0, 1, 2))                      # (co, ky, kx, ci)
    if cin_pad > ci:
        wt = jnp.pad(wt, ((0, 0), (0, 0), (0, 0), (0, cin_pad - ci)))
    return wt.reshape(co, 9 * cin_pad).astype(jnp.bfloat16)


def _make_fused_kernel(n, h, w, cin_pad, cout, eps):
    p = h * w
    inv_count = 1.0 / float(n * p)
    cpad2 = _round_up(cout, 8)                                     # conv2 input-channel pad

    def kernel(x_ref, m_ref, w1_ref, w2_ref, bn_ref, o_ref):
        masks = m_ref[...]                                         # (9, p) f32, loaded once

        def conv3x3(x, w_ref):
            # x: (cpad, p) f32 -> (cout, p) f32 via one im2col MXU matmul.
            taps = []
            idx = 0
            for dy in (-1, 0, 1):
                for dx in (-1, 0, 1):
                    amt = (-(dy * w + dx)) % p                     # result[q] = x[q + dy*w + dx]
                    shifted = pltpu.roll(x, shift=amt, axis=1) if amt else x
                    taps.append(shifted * masks[idx:idx + 1])      # zero "same" padding
                    idx += 1
            # Tile-aligned f32 concat (each tap is an (8k, p) slab), single cast to bf16.
            patches = jnp.concatenate(taps, axis=0).astype(jnp.bfloat16)
            return jnp.dot(w_ref[...], patches, preferred_element_type=jnp.float32)

        def bn_affine(s, q, gamma, beta):
            mean = s * inv_count
            # NOTE: E[x^2]-E[x]^2 is fine at count = n*h*w = 512; switch to a shifted /
            # two-pass form if scaled to production sizes (cancellation risk post-ReLU).
            var = q * inv_count - mean * mean                      # biased var (PyTorch BN fwd)
            scale = gamma * jax.lax.rsqrt(var + eps)
            shift = beta - mean * scale
            return scale, shift

        g1, b1 = bn_ref[:, 0:1], bn_ref[:, 1:2]
        g2, b2 = bn_ref[:, 2:3], bn_ref[:, 3:4]

        # ---- layer 1: conv1 + per-channel batch stats (bias omitted: cancels in BN) ----
        y1 = []
        s1 = jnp.zeros((cout, 1), jnp.float32)
        q1 = jnp.zeros((cout, 1), jnp.float32)
        for i in range(n):
            y = conv3x3(x_ref[i], w1_ref)
            y1.append(y)
            s1 = s1 + jnp.sum(y, axis=1, keepdims=True)
            q1 = q1 + jnp.sum(y * y, axis=1, keepdims=True)
        sc1, sh1 = bn_affine(s1, q1, g1, b1)

        # ---- layer 2: BN1-ReLU fused into conv2 + stats ----
        y2 = []
        s2 = jnp.zeros((cout, 1), jnp.float32)
        q2 = jnp.zeros((cout, 1), jnp.float32)
        for i in range(n):
            a = jnp.maximum(y1[i] * sc1 + sh1, 0.0)
            if cpad2 > cout:
                a = jnp.concatenate(
                    [a, jnp.zeros((cpad2 - cout, p), jnp.float32)], axis=0)
            y = conv3x3(a, w2_ref)
            y2.append(y)
            s2 = s2 + jnp.sum(y, axis=1, keepdims=True)
            q2 = q2 + jnp.sum(y * y, axis=1, keepdims=True)
        sc2, sh2 = bn_affine(s2, q2, g2, b2)

        # ---- final BN2-ReLU, lane-dense stores ----
        for i in range(n):
            o_ref[i] = jnp.maximum(y2[i] * sc2 + sh2, 0.0)

    return kernel


def conv_block_forward(x_nchw, params, eps=1e-5):
    n, cin, h, w = x_nchw.shape
    p = h * w
    cout = params["w1"].shape[3]
    cin_pad = _round_up(cin, 8)
    cpad2 = _round_up(cout, 8)

    x = x_nchw.astype(jnp.float32).reshape(n, cin, p)
    if cin_pad > cin:
        x = jnp.pad(x, ((0, 0), (0, cin_pad - cin), (0, 0)))

    masks = jnp.asarray(_build_masks(h, w))                        # constant under jit
    w1 = _pack_weights(params["w1"], cin_pad)
    w2 = _pack_weights(params["w2"], cpad2)
    bn = jnp.stack([params["gamma1"], params["beta1"],
                    params["gamma2"], params["beta2"]], axis=1).astype(jnp.float32)

    out = pl.pallas_call(
        _make_fused_kernel(n, h, w, cin_pad, cout, eps),
        out_shape=jax.ShapeDtypeStruct((n, cout, p), jnp.float32),
        grid_spec=pltpu.PrefetchScalarGridSpec(
            num_scalar_prefetch=0,
            grid=(1,),
            in_specs=[
                pl.BlockSpec((n, cin_pad, p), lambda i: (0, 0, 0)),
                pl.BlockSpec((9, p), lambda i: (0, 0)),
                pl.BlockSpec((cout, 9 * cin_pad), lambda i: (0, 0)),
                pl.BlockSpec((cout, 9 * cpad2), lambda i: (0, 0)),
                pl.BlockSpec((cout, 4), lambda i: (0, 0)),
            ],
            out_specs=pl.BlockSpec((n, cout, p), lambda i: (0, 0, 0))),
        compiler_params=pltpu.CompilerParams(
            dimension_semantics=("arbitrary",)),
    )(x, masks, w1, w2, bn)
    return out.reshape(n, cout, h, w)


def init_params(key, ch_in, ch_out):
    k1, k2, k3, k4 = jax.random.split(key, 4)
    return {
        "w1": 0.1 * jax.random.normal(k1, (3, 3, ch_in, ch_out), jnp.float32),
        "b1": 0.05 * jax.random.normal(k2, (ch_out,), jnp.float32),
        "gamma1": jnp.ones((ch_out,), jnp.float32),
        "beta1": jnp.zeros((ch_out,), jnp.float32),
        "w2": 0.1 * jax.random.normal(k3, (3, 3, ch_out, ch_out), jnp.float32),
        "b2": 0.05 * jax.random.normal(k4, (ch_out,), jnp.float32),
        "gamma2": jnp.ones((ch_out,), jnp.float32),
        "beta2": jnp.zeros((ch_out,), jnp.float32),
    }


# Pure-JAX f32 reference with the PyTorch semantics (conv+bias -> BN(train) -> ReLU) x 2.
def _ref_forward(x_nchw, params, eps=1e-5):
    x = x_nchw.astype(jnp.float32)
    for i in (1, 2):
        y = jax.lax.conv_general_dilated(
            x, params[f"w{i}"], window_strides=(1, 1), padding="SAME",
            dimension_numbers=("NCHW", "HWIO", "NCHW"))
        y = y + params[f"b{i}"].reshape(1, -1, 1, 1)
        mean = jnp.mean(y, axis=(0, 2, 3), keepdims=True)
        var = jnp.mean((y - mean) ** 2, axis=(0, 2, 3), keepdims=True)
        y = (y - mean) * jax.lax.rsqrt(var + eps)
        y = y * params[f"gamma{i}"].reshape(1, -1, 1, 1) \
            + params[f"beta{i}"].reshape(1, -1, 1, 1)
        x = jnp.maximum(y, 0.0)
    return x


if __name__ == "__main__":
    key = jax.random.PRNGKey(0)
    kx, kp = jax.random.split(key)
    ch_in, ch_out = 4, 8
    x = jax.random.normal(kx, (2, ch_in, 16, 16), jnp.float32)     # NCHW like torch
    params = init_params(kp, ch_in, ch_out)

    fwd = jax.jit(conv_block_forward)
    out = jax.block_until_ready(fwd(x, params))
    assert out.shape == (2, ch_out, 16, 16)

    ref = _ref_forward(x, params)
    err = float(jnp.max(jnp.abs(out - ref)))
    # Tolerance accounts for bf16 MXU operands (f32 accumulation) vs pure-f32 reference.
    assert err < 5e-2, f"max abs error {err}"
    print("KERNEL_OK")
</pallas_src>

<mosaic_0001>
module attributes {stable_mosaic.version = 11 : i64} {
  func.func @kernel(%arg0: i32, %arg1: memref<2x8x256xf32, #tpu.memory_space<vmem>>, %arg2: memref<9x256xf32, #tpu.memory_space<vmem>>, %arg3: memref<8x72xbf16, #tpu.memory_space<vmem>>, %arg4: memref<8x72xbf16, #tpu.memory_space<vmem>>, %arg5: memref<8x4xf32, #tpu.memory_space<vmem>>, %arg6: memref<2x8x256xf32, #tpu.memory_space<vmem>>) attributes {dimension_semantics = [#tpu.dimension_semantics<arbitrary>], iteration_bounds = array<i64: 1>, scalar_prefetch = 0 : i64, scratch_operands = 0 : i64, tpu.core_type = #tpu.core_type<tc>, window_params = [{pipeline_mode = #tpu.pipeline_mode<synchronous>, transform_indices = @transform_0, window_bounds = array<i64: 2, 8, 256>}, {pipeline_mode = #tpu.pipeline_mode<synchronous>, transform_indices = @transform_1, window_bounds = array<i64: 9, 256>}, {pipeline_mode = #tpu.pipeline_mode<synchronous>, transform_indices = @transform_2, window_bounds = array<i64: 8, 72>}, {pipeline_mode = #tpu.pipeline_mode<synchronous>, transform_indices = @transform_3, window_bounds = array<i64: 8, 72>}, {pipeline_mode = #tpu.pipeline_mode<synchronous>, transform_indices = @transform_4, window_bounds = array<i64: 8, 4>}, {pipeline_mode = #tpu.pipeline_mode<synchronous>, transform_indices = @transform_5, window_bounds = array<i64: 2, 8, 256>}]} {
    %c0 = arith.constant 0 : index
    %c0_0 = arith.constant 0 : index
    %0 = vector.load %arg2[%c0, %c0_0] : memref<9x256xf32, #tpu.memory_space<vmem>>, vector<9x256xf32>
    %c0_1 = arith.constant 0 : index
    %c0_2 = arith.constant 0 : index
    %1 = vector.load %arg5[%c0_1, %c0_2] : memref<8x4xf32, #tpu.memory_space<vmem>>, vector<8x1xf32>
    %c0_3 = arith.constant 0 : index
    %c1 = arith.constant 1 : index
    %2 = vector.load %arg5[%c0_3, %c1] : memref<8x4xf32, #tpu.memory_space<vmem>>, vector<8x1xf32>
    %c0_4 = arith.constant 0 : index
    %c2 = arith.constant 2 : index
    %3 = vector.load %arg5[%c0_4, %c2] : memref<8x4xf32, #tpu.memory_space<vmem>>, vector<8x1xf32>
    %c0_5 = arith.constant 0 : index
    %c3 = arith.constant 3 : index
    %4 = vector.load %arg5[%c0_5, %c3] : memref<8x4xf32, #tpu.memory_space<vmem>>, vector<8x1xf32>
    %cst = arith.constant 0.000000e+00 : f32
    %5 = vector.broadcast %cst : f32 to vector<8x1xf32>
    %cst_6 = arith.constant 0.000000e+00 : f32
    %6 = vector.broadcast %cst_6 : f32 to vector<8x1xf32>
    %c0_7 = arith.constant 0 : index
    %c0_8 = arith.constant 0 : index
    %c0_9 = arith.constant 0 : index
    %7 = vector.load %arg1[%c0_7, %c0_8, %c0_9] : memref<2x8x256xf32, #tpu.memory_space<vmem>>, vector<1x8x256xf32>
    %8 = vector.shape_cast %7 : vector<1x8x256xf32> to vector<8x256xf32>
    %c17_i32 = arith.constant 17 : i32
    %9 = tpu.dynamic_rotate %8 by %c17_i32 dim 1 : vector<8x256xf32>, i32 -> vector<8x256xf32>
    %10 = vector.extract_strided_slice %0 {offsets = [0, 0], sizes = [1, 256], strides = [1, 1]} : vector<9x256xf32> to vector<1x256xf32>
    %11 = vector.broadcast %10 : vector<1x256xf32> to vector<8x256xf32>
    %12 = arith.mulf %9, %11 : vector<8x256xf32>
    %c16_i32 = arith.constant 16 : i32
    %13 = tpu.dynamic_rotate %8 by %c16_i32 dim 1 : vector<8x256xf32>, i32 -> vector<8x256xf32>
    %14 = vector.extract_strided_slice %0 {offsets = [1, 0], sizes = [1, 256], strides = [1, 1]} : vector<9x256xf32> to vector<1x256xf32>
    %15 = vector.broadcast %14 : vector<1x256xf32> to vector<8x256xf32>
    %16 = arith.mulf %13, %15 : vector<8x256xf32>
    %c15_i32 = arith.constant 15 : i32
    %17 = tpu.dynamic_rotate %8 by %c15_i32 dim 1 : vector<8x256xf32>, i32 -> vector<8x256xf32>
    %18 = vector.extract_strided_slice %0 {offsets = [2, 0], sizes = [1, 256], strides = [1, 1]} : vector<9x256xf32> to vector<1x256xf32>
    %19 = vector.broadcast %18 : vector<1x256xf32> to vector<8x256xf32>
    %20 = arith.mulf %17, %19 : vector<8x256xf32>
    %c1_i32 = arith.constant 1 : i32
    %21 = tpu.dynamic_rotate %8 by %c1_i32 dim 1 : vector<8x256xf32>, i32 -> vector<8x256xf32>
    %22 = vector.extract_strided_slice %0 {offsets = [3, 0], sizes = [1, 256], strides = [1, 1]} : vector<9x256xf32> to vector<1x256xf32>
    %23 = vector.broadcast %22 : vector<1x256xf32> to vector<8x256xf32>
    %24 = arith.mulf %21, %23 : vector<8x256xf32>
    %25 = vector.extract_strided_slice %0 {offsets = [4, 0], sizes = [1, 256], strides = [1, 1]} : vector<9x256xf32> to vector<1x256xf32>
    %26 = vector.broadcast %25 : vector<1x256xf32> to vector<8x256xf32>
    %27 = arith.mulf %8, %26 : vector<8x256xf32>
    %c255_i32 = arith.constant 255 : i32
    %28 = tpu.dynamic_rotate %8 by %c255_i32 dim 1 : vector<8x256xf32>, i32 -> vector<8x256xf32>
    %29 = vector.extract_strided_slice %0 {offsets = [5, 0], sizes = [1, 256], strides = [1, 1]} : vector<9x256xf32> to vector<1x256xf32>
    %30 = vector.broadcast %29 : vector<1x256xf32> to vector<8x256xf32>
    %31 = arith.mulf %28, %30 : vector<8x256xf32>
    %c241_i32 = arith.constant 241 : i32
    %32 = tpu.dynamic_rotate %8 by %c241_i32 dim 1 : vector<8x256xf32>, i32 -> vector<8x256xf32>
    %33 = vector.extract_strided_slice %0 {offsets = [6, 0], sizes = [1, 256], strides = [1, 1]} : vector<9x256xf32> to vector<1x256xf32>
    %34 = vector.broadcast %33 : vector<1x256xf32> to vector<8x256xf32>
    %35 = arith.mulf %32, %34 : vector<8x256xf32>
    %c240_i32 = arith.constant 240 : i32
    %36 = tpu.dynamic_rotate %8 by %c240_i32 dim 1 : vector<8x256xf32>, i32 -> vector<8x256xf32>
    %37 = vector.extract_strided_slice %0 {offsets = [7, 0], sizes = [1, 256], strides = [1, 1]} : vector<9x256xf32> to vector<1x256xf32>
    %38 = vector.broadcast %37 : vector<1x256xf32> to vector<8x256xf32>
    %39 = arith.mulf %36, %38 : vector<8x256xf32>
    %c239_i32 = arith.constant 239 : i32
    %40 = tpu.dynamic_rotate %8 by %c239_i32 dim 1 : vector<8x256xf32>, i32 -> vector<8x256xf32>
    %41 = vector.extract_strided_slice %0 {offsets = [8, 0], sizes = [1, 256], strides = [1, 1]} : vector<9x256xf32> to vector<1x256xf32>
    %42 = vector.broadcast %41 : vector<1x256xf32> to vector<8x256xf32>
    %43 = arith.mulf %40, %42 : vector<8x256xf32>
    %44 = tpu.concatenate %12, %16, %20, %24, %27, %31, %35, %39, %43 in 0 : vector<8x256xf32>, vector<8x256xf32>, vector<8x256xf32>, vector<8x256xf32>, vector<8x256xf32>, vector<8x256xf32>, vector<8x256xf32>, vector<8x256xf32>, vector<8x256xf32> -> vector<72x256xf32>
    %45 = arith.truncf %44 : vector<72x256xf32> to vector<72x256xbf16>
    %c0_10 = arith.constant 0 : index
    %c0_11 = arith.constant 0 : index
    %46 = vector.load %arg3[%c0_10, %c0_11] : memref<8x72xbf16, #tpu.memory_space<vmem>>, vector<8x72xbf16>
    %cst_12 = arith.constant dense<0.000000e+00> : vector<8x256xf32>
    %47 = tpu.matmul %46, %45, %cst_12 {dimension_numbers = #tpu.dot_dimension_numbers<[1], [0], [0], [1], [0, 0, 1, 1], [], []>} : vector<8x72xbf16>, vector<72x256xbf16>, vector<8x256xf32> -> vector<8x256xf32>
    %cst_13 = arith.constant dense<0.000000e+00> : vector<8xf32>
    %48 = vector.multi_reduction <add>, %47, %cst_13 [1] : vector<8x256xf32> to vector<8xf32>
    %49 = vector.shape_cast %48 : vector<8xf32> to vector<8x1xf32>
    %50 = arith.addf %5, %49 : vector<8x1xf32>
    %51 = arith.mulf %47, %47 : vector<8x256xf32>
    %cst_14 = arith.constant dense<0.000000e+00> : vector<8xf32>
    %52 = vector.multi_reduction <add>, %51, %cst_14 [1] : vector<8x256xf32> to vector<8xf32>
    %53 = vector.shape_cast %52 : vector<8xf32> to vector<8x1xf32>
    %54 = arith.addf %6, %53 : vector<8x1xf32>
    %c1_15 = arith.constant 1 : index
    %c0_16 = arith.constant 0 : index
    %c0_17 = arith.constant 0 : index
    %55 = vector.load %arg1[%c1_15, %c0_16, %c0_17] : memref<2x8x256xf32, #tpu.memory_space<vmem>>, vector<1x8x256xf32>
    %56 = vector.shape_cast %55 : vector<1x8x256xf32> to vector<8x256xf32>
    %c17_i32_18 = arith.constant 17 : i32
    %57 = tpu.dynamic_rotate %56 by %c17_i32_18 dim 1 : vector<8x256xf32>, i32 -> vector<8x256xf32>
    %58 = vector.extract_strided_slice %0 {offsets = [0, 0], sizes = [1, 256], strides = [1, 1]} : vector<9x256xf32> to vector<1x256xf32>
    %59 = vector.broadcast %58 : vector<1x256xf32> to vector<8x256xf32>
    %60 = arith.mulf %57, %59 : vector<8x256xf32>
    %c16_i32_19 = arith.constant 16 : i32
    %61 = tpu.dynamic_rotate %56 by %c16_i32_19 dim 1 : vector<8x256xf32>, i32 -> vector<8x256xf32>
    %62 = vector.extract_strided_slice %0 {offsets = [1, 0], sizes = [1, 256], strides = [1, 1]} : vector<9x256xf32> to vector<1x256xf32>
    %63 = vector.broadcast %62 : vector<1x256xf32> to vector<8x256xf32>
    %64 = arith.mulf %61, %63 : vector<8x256xf32>
    %c15_i32_20 = arith.constant 15 : i32
    %65 = tpu.dynamic_rotate %56 by %c15_i32_20 dim 1 : vector<8x256xf32>, i32 -> vector<8x256xf32>
    %66 = vector.extract_strided_slice %0 {offsets = [2, 0], sizes = [1, 256], strides = [1, 1]} : vector<9x256xf32> to vector<1x256xf32>
    %67 = vector.broadcast %66 : vector<1x256xf32> to vector<8x256xf32>
    %68 = arith.mulf %65, %67 : vector<8x256xf32>
    %c1_i32_21 = arith.constant 1 : i32
    %69 = tpu.dynamic_rotate %56 by %c1_i32_21 dim 1 : vector<8x256xf32>, i32 -> vector<8x256xf32>
    %70 = vector.extract_strided_slice %0 {offsets = [3, 0], sizes = [1, 256], strides = [1, 1]} : vector<9x256xf32> to vector<1x256xf32>
    %71 = vector.broadcast %70 : vector<1x256xf32> to vector<8x256xf32>
    %72 = arith.mulf %69, %71 : vector<8x256xf32>
    %73 = vector.extract_strided_slice %0 {offsets = [4, 0], sizes = [1, 256], strides = [1, 1]} : vector<9x256xf32> to vector<1x256xf32>
    %74 = vector.broadcast %73 : vector<1x256xf32> to vector<8x256xf32>
    %75 = arith.mulf %56, %74 : vector<8x256xf32>
    %c255_i32_22 = arith.constant 255 : i32
    %76 = tpu.dynamic_rotate %56 by %c255_i32_22 dim 1 : vector<8x256xf32>, i32 -> vector<8x256xf32>
    %77 = vector.extract_strided_slice %0 {offsets = [5, 0], sizes = [1, 256], strides = [1, 1]} : vector<9x256xf32> to vector<1x256xf32>
    %78 = vector.broadcast %77 : vector<1x256xf32> to vector<8x256xf32>
    %79 = arith.mulf %76, %78 : vector<8x256xf32>
    %c241_i32_23 = arith.constant 241 : i32
    %80 = tpu.dynamic_rotate %56 by %c241_i32_23 dim 1 : vector<8x256xf32>, i32 -> vector<8x256xf32>
    %81 = vector.extract_strided_slice %0 {offsets = [6, 0], sizes = [1, 256], strides = [1, 1]} : vector<9x256xf32> to vector<1x256xf32>
    %82 = vector.broadcast %81 : vector<1x256xf32> to vector<8x256xf32>
    %83 = arith.mulf %80, %82 : vector<8x256xf32>
    %c240_i32_24 = arith.constant 240 : i32
    %84 = tpu.dynamic_rotate %56 by %c240_i32_24 dim 1 : vector<8x256xf32>, i32 -> vector<8x256xf32>
    %85 = vector.extract_strided_slice %0 {offsets = [7, 0], sizes = [1, 256], strides = [1, 1]} : vector<9x256xf32> to vector<1x256xf32>
    %86 = vector.broadcast %85 : vector<1x256xf32> to vector<8x256xf32>
    %87 = arith.mulf %84, %86 : vector<8x256xf32>
    %c239_i32_25 = arith.constant 239 : i32
    %88 = tpu.dynamic_rotate %56 by %c239_i32_25 dim 1 : vector<8x256xf32>, i32 -> vector<8x256xf32>
    %89 = vector.extract_strided_slice %0 {offsets = [8, 0], sizes = [1, 256], strides = [1, 1]} : vector<9x256xf32> to vector<1x256xf32>
    %90 = vector.broadcast %89 : vector<1x256xf32> to vector<8x256xf32>
    %91 = arith.mulf %88, %90 : vector<8x256xf32>
    %92 = tpu.concatenate %60, %64, %68, %72, %75, %79, %83, %87, %91 in 0 : vector<8x256xf32>, vector<8x256xf32>, vector<8x256xf32>, vector<8x256xf32>, vector<8x256xf32>, vector<8x256xf32>, vector<8x256xf32>, vector<8x256xf32>, vector<8x256xf32> -> vector<72x256xf32>
    %93 = arith.truncf %92 : vector<72x256xf32> to vector<72x256xbf16>
    %c0_26 = arith.constant 0 : index
    %c0_27 = arith.constant 0 : index
    %94 = vector.load %arg3[%c0_26, %c0_27] : memref<8x72xbf16, #tpu.memory_space<vmem>>, vector<8x72xbf16>
    %cst_28 = arith.constant dense<0.000000e+00> : vector<8x256xf32>
    %95 = tpu.matmul %94, %93, %cst_28 {dimension_numbers = #tpu.dot_dimension_numbers<[1], [0], [0], [1], [0, 0, 1, 1], [], []>} : vector<8x72xbf16>, vector<72x256xbf16>, vector<8x256xf32> -> vector<8x256xf32>
    %cst_29 = arith.constant dense<0.000000e+00> : vector<8xf32>
    %96 = vector.multi_reduction <add>, %95, %cst_29 [1] : vector<8x256xf32> to vector<8xf32>
    %97 = vector.shape_cast %96 : vector<8xf32> to vector<8x1xf32>
    %98 = arith.addf %50, %97 : vector<8x1xf32>
    %99 = arith.mulf %95, %95 : vector<8x256xf32>
    %cst_30 = arith.constant dense<0.000000e+00> : vector<8xf32>
    %100 = vector.multi_reduction <add>, %99, %cst_30 [1] : vector<8x256xf32> to vector<8xf32>
    %101 = vector.shape_cast %100 : vector<8xf32> to vector<8x1xf32>
    %102 = arith.addf %54, %101 : vector<8x1xf32>
    %cst_31 = arith.constant 0.001953125 : f32
    %103 = vector.broadcast %cst_31 : f32 to vector<8x1xf32>
    %104 = arith.mulf %98, %103 : vector<8x1xf32>
    %cst_32 = arith.constant 0.001953125 : f32
    %105 = vector.broadcast %cst_32 : f32 to vector<8x1xf32>
    %106 = arith.mulf %102, %105 : vector<8x1xf32>
    %107 = arith.mulf %104, %104 : vector<8x1xf32>
    %108 = arith.subf %106, %107 : vector<8x1xf32>
    %cst_33 = arith.constant 9.99999974E-6 : f32
    %109 = vector.broadcast %cst_33 : f32 to vector<8x1xf32>
    %110 = arith.addf %108, %109 : vector<8x1xf32>
    %111 = math.rsqrt %110 : vector<8x1xf32>
    %112 = arith.mulf %1, %111 : vector<8x1xf32>
    %113 = arith.mulf %104, %112 : vector<8x1xf32>
    %114 = arith.subf %2, %113 : vector<8x1xf32>
    %cst_34 = arith.constant 0.000000e+00 : f32
    %115 = vector.broadcast %cst_34 : f32 to vector<8x1xf32>
    %cst_35 = arith.constant 0.000000e+00 : f32
    %116 = vector.broadcast %cst_35 : f32 to vector<8x1xf32>
    %117 = vector.broadcast %112 : vector<8x1xf32> to vector<8x256xf32>
    %118 = arith.mulf %47, %117 : vector<8x256xf32>
    %119 = vector.broadcast %114 : vector<8x1xf32> to vector<8x256xf32>
    %120 = arith.addf %118, %119 : vector<8x256xf32>
    %cst_36 = arith.constant 0.000000e+00 : f32
    %121 = vector.broadcast %cst_36 : f32 to vector<8x256xf32>
    %122 = arith.maximumf %120, %121 : vector<8x256xf32>
    %c17_i32_37 = arith.constant 17 : i32
    %123 = tpu.dynamic_rotate %122 by %c17_i32_37 dim 1 : vector<8x256xf32>, i32 -> vector<8x256xf32>
    %124 = vector.extract_strided_slice %0 {offsets = [0, 0], sizes = [1, 256], strides = [1, 1]} : vector<9x256xf32> to vector<1x256xf32>
    %125 = vector.broadcast %124 : vector<1x256xf32> to vector<8x256xf32>
    %126 = arith.mulf %123, %125 : vector<8x256xf32>
    %c16_i32_38 = arith.constant 16 : i32
    %127 = tpu.dynamic_rotate %122 by %c16_i32_38 dim 1 : vector<8x256xf32>, i32 -> vector<8x256xf32>
    %128 = vector.extract_strided_slice %0 {offsets = [1, 0], sizes = [1, 256], strides = [1, 1]} : vector<9x256xf32> to vector<1x256xf32>
    %129 = vector.broadcast %128 : vector<1x256xf32> to vector<8x256xf32>
    %130 = arith.mulf %127, %129 : vector<8x256xf32>
    %c15_i32_39 = arith.constant 15 : i32
    %131 = tpu.dynamic_rotate %122 by %c15_i32_39 dim 1 : vector<8x256xf32>, i32 -> vector<8x256xf32>
    %132 = vector.extract_strided_slice %0 {offsets = [2, 0], sizes = [1, 256], strides = [1, 1]} : vector<9x256xf32> to vector<1x256xf32>
    %133 = vector.broadcast %132 : vector<1x256xf32> to vector<8x256xf32>
    %134 = arith.mulf %131, %133 : vector<8x256xf32>
    %c1_i32_40 = arith.constant 1 : i32
    %135 = tpu.dynamic_rotate %122 by %c1_i32_40 dim 1 : vector<8x256xf32>, i32 -> vector<8x256xf32>
    %136 = vector.extract_strided_slice %0 {offsets = [3, 0], sizes = [1, 256], strides = [1, 1]} : vector<9x256xf32> to vector<1x256xf32>
    %137 = vector.broadcast %136 : vector<1x256xf32> to vector<8x256xf32>
    %138 = arith.mulf %135, %137 : vector<8x256xf32>
    %139 = vector.extract_strided_slice %0 {offsets = [4, 0], sizes = [1, 256], strides = [1, 1]} : vector<9x256xf32> to vector<1x256xf32>
    %140 = vector.broadcast %139 : vector<1x256xf32> to vector<8x256xf32>
    %141 = arith.mulf %122, %140 : vector<8x256xf32>
    %c255_i32_41 = arith.constant 255 : i32
    %142 = tpu.dynamic_rotate %122 by %c255_i32_41 dim 1 : vector<8x256xf32>, i32 -> vector<8x256xf32>
    %143 = vector.extract_strided_slice %0 {offsets = [5, 0], sizes = [1, 256], strides = [1, 1]} : vector<9x256xf32> to vector<1x256xf32>
    %144 = vector.broadcast %143 : vector<1x256xf32> to vector<8x256xf32>
    %145 = arith.mulf %142, %144 : vector<8x256xf32>
    %c241_i32_42 = arith.constant 241 : i32
    %146 = tpu.dynamic_rotate %122 by %c241_i32_42 dim 1 : vector<8x256xf32>, i32 -> vector<8x256xf32>
    %147 = vector.extract_strided_slice %0 {offsets = [6, 0], sizes = [1, 256], strides = [1, 1]} : vector<9x256xf32> to vector<1x256xf32>
    %148 = vector.broadcast %147 : vector<1x256xf32> to vector<8x256xf32>
    %149 = arith.mulf %146, %148 : vector<8x256xf32>
    %c240_i32_43 = arith.constant 240 : i32
    %150 = tpu.dynamic_rotate %122 by %c240_i32_43 dim 1 : vector<8x256xf32>, i32 -> vector<8x256xf32>
    %151 = vector.extract_strided_slice %0 {offsets = [7, 0], sizes = [1, 256], strides = [1, 1]} : vector<9x256xf32> to vector<1x256xf32>
    %152 = vector.broadcast %151 : vector<1x256xf32> to vector<8x256xf32>
    %153 = arith.mulf %150, %152 : vector<8x256xf32>
    %c239_i32_44 = arith.constant 239 : i32
    %154 = tpu.dynamic_rotate %122 by %c239_i32_44 dim 1 : vector<8x256xf32>, i32 -> vector<8x256xf32>
    %155 = vector.extract_strided_slice %0 {offsets = [8, 0], sizes = [1, 256], strides = [1, 1]} : vector<9x256xf32> to vector<1x256xf32>
    %156 = vector.broadcast %155 : vector<1x256xf32> to vector<8x256xf32>
    %157 = arith.mulf %154, %156 : vector<8x256xf32>
    %158 = tpu.concatenate %126, %130, %134, %138, %141, %145, %149, %153, %157 in 0 : vector<8x256xf32>, vector<8x256xf32>, vector<8x256xf32>, vector<8x256xf32>, vector<8x256xf32>, vector<8x256xf32>, vector<8x256xf32>, vector<8x256xf32>, vector<8x256xf32> -> vector<72x256xf32>
    %159 = arith.truncf %158 : vector<72x256xf32> to vector<72x256xbf16>
    %c0_45 = arith.constant 0 : index
    %c0_46 = arith.constant 0 : index
    %160 = vector.load %arg4[%c0_45, %c0_46] : memref<8x72xbf16, #tpu.memory_space<vmem>>, vector<8x72xbf16>
    %cst_47 = arith.constant dense<0.000000e+00> : vector<8x256xf32>
    %161 = tpu.matmul %160, %159, %cst_47 {dimension_numbers = #tpu.dot_dimension_numbers<[1], [0], [0], [1], [0, 0, 1, 1], [], []>} : vector<8x72xbf16>, vector<72x256xbf16>, vector<8x256xf32> -> vector<8x256xf32>
    %cst_48 = arith.constant dense<0.000000e+00> : vector<8xf32>
    %162 = vector.multi_reduction <add>, %161, %cst_48 [1] : vector<8x256xf32> to vector<8xf32>
    %163 = vector.shape_cast %162 : vector<8xf32> to vector<8x1xf32>
    %164 = arith.addf %115, %163 : vector<8x1xf32>
    %165 = arith.mulf %161, %161 : vector<8x256xf32>
    %cst_49 = arith.constant dense<0.000000e+00> : vector<8xf32>
    %166 = vector.multi_reduction <add>, %165, %cst_49 [1] : vector<8x256xf32> to vector<8xf32>
    %167 = vector.shape_cast %166 : vector<8xf32> to vector<8x1xf32>
    %168 = arith.addf %116, %167 : vector<8x1xf32>
    %169 = vector.broadcast %112 : vector<8x1xf32> to vector<8x256xf32>
    %170 = arith.mulf %95, %169 : vector<8x256xf32>
    %171 = vector.broadcast %114 : vector<8x1xf32> to vector<8x256xf32>
    %172 = arith.addf %170, %171 : vector<8x256xf32>
    %cst_50 = arith.constant 0.000000e+00 : f32
    %173 = vector.broadcast %cst_50 : f32 to vector<8x256xf32>
    %174 = arith.maximumf %172, %173 : vector<8x256xf32>
    %c17_i32_51 = arith.constant 17 : i32
    %175 = tpu.dynamic_rotate %174 by %c17_i32_51 dim 1 : vector<8x256xf32>, i32 -> vector<8x256xf32>
    %176 = vector.extract_strided_slice %0 {offsets = [0, 0], sizes = [1, 256], strides = [1, 1]} : vector<9x256xf32> to vector<1x256xf32>
    %177 = vector.broadcast %176 : vector<1x256xf32> to vector<8x256xf32>
    %178 = arith.mulf %175, %177 : vector<8x256xf32>
    %c16_i32_52 = arith.constant 16 : i32
    %179 = tpu.dynamic_rotate %174 by %c16_i32_52 dim 1 : vector<8x256xf32>, i32 -> vector<8x256xf32>
    %180 = vector.extract_strided_slice %0 {offsets = [1, 0], sizes = [1, 256], strides = [1, 1]} : vector<9x256xf32> to vector<1x256xf32>
    %181 = vector.broadcast %180 : vector<1x256xf32> to vector<8x256xf32>
    %182 = arith.mulf %179, %181 : vector<8x256xf32>
    %c15_i32_53 = arith.constant 15 : i32
    %183 = tpu.dynamic_rotate %174 by %c15_i32_53 dim 1 : vector<8x256xf32>, i32 -> vector<8x256xf32>
    %184 = vector.extract_strided_slice %0 {offsets = [2, 0], sizes = [1, 256], strides = [1, 1]} : vector<9x256xf32> to vector<1x256xf32>
    %185 = vector.broadcast %184 : vector<1x256xf32> to vector<8x256xf32>
    %186 = arith.mulf %183, %185 : vector<8x256xf32>
    %c1_i32_54 = arith.constant 1 : i32
    %187 = tpu.dynamic_rotate %174 by %c1_i32_54 dim 1 : vector<8x256xf32>, i32 -> vector<8x256xf32>
    %188 = vector.extract_strided_slice %0 {offsets = [3, 0], sizes = [1, 256], strides = [1, 1]} : vector<9x256xf32> to vector<1x256xf32>
    %189 = vector.broadcast %188 : vector<1x256xf32> to vector<8x256xf32>
    %190 = arith.mulf %187, %189 : vector<8x256xf32>
    %191 = vector.extract_strided_slice %0 {offsets = [4, 0], sizes = [1, 256], strides = [1, 1]} : vector<9x256xf32> to vector<1x256xf32>
    %192 = vector.broadcast %191 : vector<1x256xf32> to vector<8x256xf32>
    %193 = arith.mulf %174, %192 : vector<8x256xf32>
    %c255_i32_55 = arith.constant 255 : i32
    %194 = tpu.dynamic_rotate %174 by %c255_i32_55 dim 1 : vector<8x256xf32>, i32 -> vector<8x256xf32>
    %195 = vector.extract_strided_slice %0 {offsets = [5, 0], sizes = [1, 256], strides = [1, 1]} : vector<9x256xf32> to vector<1x256xf32>
    %196 = vector.broadcast %195 : vector<1x256xf32> to vector<8x256xf32>
    %197 = arith.mulf %194, %196 : vector<8x256xf32>
    %c241_i32_56 = arith.constant 241 : i32
    %198 = tpu.dynamic_rotate %174 by %c241_i32_56 dim 1 : vector<8x256xf32>, i32 -> vector<8x256xf32>
    %199 = vector.extract_strided_slice %0 {offsets = [6, 0], sizes = [1, 256], strides = [1, 1]} : vector<9x256xf32> to vector<1x256xf32>
    %200 = vector.broadcast %199 : vector<1x256xf32> to vector<8x256xf32>
    %201 = arith.mulf %198, %200 : vector<8x256xf32>
    %c240_i32_57 = arith.constant 240 : i32
    %202 = tpu.dynamic_rotate %174 by %c240_i32_57 dim 1 : vector<8x256xf32>, i32 -> vector<8x256xf32>
    %203 = vector.extract_strided_slice %0 {offsets = [7, 0], sizes = [1, 256], strides = [1, 1]} : vector<9x256xf32> to vector<1x256xf32>
    %204 = vector.broadcast %203 : vector<1x256xf32> to vector<8x256xf32>
    %205 = arith.mulf %202, %204 : vector<8x256xf32>
    %c239_i32_58 = arith.constant 239 : i32
    %206 = tpu.dynamic_rotate %174 by %c239_i32_58 dim 1 : vector<8x256xf32>, i32 -> vector<8x256xf32>
    %207 = vector.extract_strided_slice %0 {offsets = [8, 0], sizes = [1, 256], strides = [1, 1]} : vector<9x256xf32> to vector<1x256xf32>
    %208 = vector.broadcast %207 : vector<1x256xf32> to vector<8x256xf32>
    %209 = arith.mulf %206, %208 : vector<8x256xf32>
    %210 = tpu.concatenate %178, %182, %186, %190, %193, %197, %201, %205, %209 in 0 : vector<8x256xf32>, vector<8x256xf32>, vector<8x256xf32>, vector<8x256xf32>, vector<8x256xf32>, vector<8x256xf32>, vector<8x256xf32>, vector<8x256xf32>, vector<8x256xf32> -> vector<72x256xf32>
    %211 = arith.truncf %210 : vector<72x256xf32> to vector<72x256xbf16>
    %c0_59 = arith.constant 0 : index
    %c0_60 = arith.constant 0 : index
    %212 = vector.load %arg4[%c0_59, %c0_60] : memref<8x72xbf16, #tpu.memory_space<vmem>>, vector<8x72xbf16>
    %cst_61 = arith.constant dense<0.000000e+00> : vector<8x256xf32>
    %213 = tpu.matmul %212, %211, %cst_61 {dimension_numbers = #tpu.dot_dimension_numbers<[1], [0], [0], [1], [0, 0, 1, 1], [], []>} : vector<8x72xbf16>, vector<72x256xbf16>, vector<8x256xf32> -> vector<8x256xf32>
    %cst_62 = arith.constant dense<0.000000e+00> : vector<8xf32>
    %214 = vector.multi_reduction <add>, %213, %cst_62 [1] : vector<8x256xf32> to vector<8xf32>
    %215 = vector.shape_cast %214 : vector<8xf32> to vector<8x1xf32>
    %216 = arith.addf %164, %215 : vector<8x1xf32>
    %217 = arith.mulf %213, %213 : vector<8x256xf32>
    %cst_63 = arith.constant dense<0.000000e+00> : vector<8xf32>
    %218 = vector.multi_reduction <add>, %217, %cst_63 [1] : vector<8x256xf32> to vector<8xf32>
    %219 = vector.shape_cast %218 : vector<8xf32> to vector<8x1xf32>
    %220 = arith.addf %168, %219 : vector<8x1xf32>
    %cst_64 = arith.constant 0.001953125 : f32
    %221 = vector.broadcast %cst_64 : f32 to vector<8x1xf32>
    %222 = arith.mulf %216, %221 : vector<8x1xf32>
    %cst_65 = arith.constant 0.001953125 : f32
    %223 = vector.broadcast %cst_65 : f32 to vector<8x1xf32>
    %224 = arith.mulf %220, %223 : vector<8x1xf32>
    %225 = arith.mulf %222, %222 : vector<8x1xf32>
    %226 = arith.subf %224, %225 : vector<8x1xf32>
    %cst_66 = arith.constant 9.99999974E-6 : f32
    %227 = vector.broadcast %cst_66 : f32 to vector<8x1xf32>
    %228 = arith.addf %226, %227 : vector<8x1xf32>
    %229 = math.rsqrt %228 : vector<8x1xf32>
    %230 = arith.mulf %3, %229 : vector<8x1xf32>
    %231 = arith.mulf %222, %230 : vector<8x1xf32>
    %232 = arith.subf %4, %231 : vector<8x1xf32>
    %233 = vector.broadcast %230 : vector<8x1xf32> to vector<8x256xf32>
    %234 = arith.mulf %161, %233 : vector<8x256xf32>
    %235 = vector.broadcast %232 : vector<8x1xf32> to vector<8x256xf32>
    %236 = arith.addf %234, %235 : vector<8x256xf32>
    %cst_67 = arith.constant 0.000000e+00 : f32
    %237 = vector.broadcast %cst_67 : f32 to vector<8x256xf32>
    %238 = arith.maximumf %236, %237 : vector<8x256xf32>
    %c0_68 = arith.constant 0 : index
    %c0_69 = arith.constant 0 : index
    %c0_70 = arith.constant 0 : index
    %239 = vector.load %arg6[%c0_68, %c0_69, %c0_70] : memref<2x8x256xf32, #tpu.memory_space<vmem>>, vector<1x8x256xf32>
    %240 = vector.shape_cast %239 : vector<1x8x256xf32> to vector<8x256xf32>
    %241 = vector.shape_cast %238 : vector<8x256xf32> to vector<1x8x256xf32>
    tpu.vector_store %arg6[%c0_68, %c0_69, %c0_70], %241 {strides = array<i32>} : memref<2x8x256xf32, #tpu.memory_space<vmem>>, vector<1x8x256xf32>,
    %242 = vector.broadcast %230 : vector<8x1xf32> to vector<8x256xf32>
    %243 = arith.mulf %213, %242 : vector<8x256xf32>
    %244 = vector.broadcast %232 : vector<8x1xf32> to vector<8x256xf32>
    %245 = arith.addf %243, %244 : vector<8x256xf32>
    %cst_71 = arith.constant 0.000000e+00 : f32
    %246 = vector.broadcast %cst_71 : f32 to vector<8x256xf32>
    %247 = arith.maximumf %245, %246 : vector<8x256xf32>
    %c1_72 = arith.constant 1 : index
    %c0_73 = arith.constant 0 : index
    %c0_74 = arith.constant 0 : index
    %248 = vector.load %arg6[%c1_72, %c0_73, %c0_74] : memref<2x8x256xf32, #tpu.memory_space<vmem>>, vector<1x8x256xf32>
    %249 = vector.shape_cast %248 : vector<1x8x256xf32> to vector<8x256xf32>
    %250 = vector.shape_cast %247 : vector<8x256xf32> to vector<1x8x256xf32>
    tpu.vector_store %arg6[%c1_72, %c0_73, %c0_74], %250 {strides = array<i32>} : memref<2x8x256xf32, #tpu.memory_space<vmem>>, vector<1x8x256xf32>,
    return
  }
  func.func @transform_0(%arg0: i32) -> (i32, i32, i32) {
    %c0_i32 = arith.constant 0 : i32
    %c0_i32_0 = arith.constant 0 : i32
    %c0_i32_1 = arith.constant 0 : i32
    %c0_i32_2 = arith.constant 0 : i32
    return %c0_i32, %c0_i32_0, %c0_i32_1 : i32, i32, i32
  }
  func.func @transform_1(%arg0: i32) -> (i32, i32) {
    %c0_i32 = arith.constant 0 : i32
    %c0_i32_0 = arith.constant 0 : i32
    %c0_i32_1 = arith.constant 0 : i32
    return %c0_i32, %c0_i32_0 : i32, i32
  }
  func.func @transform_2(%arg0: i32) -> (i32, i32) {
    %c0_i32 = arith.constant 0 : i32
    %c0_i32_0 = arith.constant 0 : i32
    %c0_i32_1 = arith.constant 0 : i32
    return %c0_i32, %c0_i32_0 : i32, i32
  }
  func.func @transform_3(%arg0: i32) -> (i32, i32) {
    %c0_i32 = arith.constant 0 : i32
    %c0_i32_0 = arith.constant 0 : i32
    %c0_i32_1 = arith.constant 0 : i32
    return %c0_i32, %c0_i32_0 : i32, i32
  }
  func.func @transform_4(%arg0: i32) -> (i32, i32) {
    %c0_i32 = arith.constant 0 : i32
    %c0_i32_0 = arith.constant 0 : i32
    %c0_i32_1 = arith.constant 0 : i32
    return %c0_i32, %c0_i32_0 : i32, i32
  }
  func.func @transform_5(%arg0: i32) -> (i32, i32, i32) {
    %c0_i32 = arith.constant 0 : i32
    %c0_i32_0 = arith.constant 0 : i32
    %c0_i32_1 = arith.constant 0 : i32
    %c0_i32_2 = arith.constant 0 : i32
    return %c0_i32, %c0_i32_0, %c0_i32_1 : i32, i32, i32
  }
}

</mosaic_0001>

<llo_original>
// kernel: conv_block_forward.1
$region0: #{conv_block_forward.1}
  #allocation0 [shape = 'u32[]', space=smem, size = 0x4, offset = 0x4, fixed_abs, tag = 'smem constant byte address 0x4 - core index']
  #allocation1 [shape = 'u32[144,128]{1,0:T(1,128)}', space=vmem, size = 0x12000, scoped, tag = 'internal scratch']
  %s0 = inlined_call_operand.vmem [shape: f32[2,8,256], index: 0, kind: input, shape index: {}]
  %s1 = inlined_call_operand.vmem [shape: f32[9,256], index: 1, kind: input, shape index: {}]
  %s2 = inlined_call_operand.vmem [shape: bf16[8,72], index: 2, kind: input, shape index: {}]
  %s3 = inlined_call_operand.vmem [shape: bf16[8,72], index: 3, kind: input, shape index: {}]
  %s4 = inlined_call_operand.vmem [shape: f32[8,4], index: 4, kind: input, shape index: {}]
  %s5 = inlined_call_operand.vmem [shape: f32[2,8,256], index: 5, kind: output, shape index: {}]
  %s6 = sld [smem:[#allocation0]]
  $region30: #{conv_block_forward.1} parent=0
    _
  %s8 = ssub.s32 1, %s6
  %s9 = scalar_select 0, %s8, %s6
  // Predicated region
  $region2: #{conv_block_forward.1} parent=0 // pred_check
    _
  $region3: #{conv_block_forward.1} parent=0 // pred_check_branch
    %11 = sbr.rel (0) target = $region5
  $region4: #{conv_block_forward.1} parent=0 // pred_region
    _
  $region5: #{conv_block_forward.1} parent=0 // pred_fallthru
    _
  // Predicated region
  $region6: #{conv_block_forward.1} parent=0 // pred_check
    _
  $region7: #{conv_block_forward.1} parent=0 // pred_check_branch
    %13 = sbr.rel (0) target = $region9
  $region8: #{conv_block_forward.1} parent=0 // pred_region
    _
  $region9: #{conv_block_forward.1} parent=0 // pred_fallthru
    _
  // Predicated region
  $region10: #{conv_block_forward.1} parent=0 // pred_check
    _
  $region11: #{conv_block_forward.1} parent=0 // pred_check_branch
    %15 = sbr.rel (0) target = $region13
  $region12: #{conv_block_forward.1} parent=0 // pred_region
    _
  $region13: #{conv_block_forward.1} parent=0 // pred_fallthru
    _
  // Predicated region
  $region14: #{conv_block_forward.1} parent=0 // pred_check
    _
  $region15: #{conv_block_forward.1} parent=0 // pred_check_branch
    %17 = sbr.rel (0) target = $region17
  $region16: #{conv_block_forward.1} parent=0 // pred_region
    _
  $region17: #{conv_block_forward.1} parent=0 // pred_fallthru
    _
  // Predicated region
  $region18: #{conv_block_forward.1} parent=0 // pred_check
    _
  $region19: #{conv_block_forward.1} parent=0 // pred_check_branch
    %19 = sbr.rel (0) target = $region21
  $region20: #{conv_block_forward.1} parent=0 // pred_region
    _
  $region21: #{conv_block_forward.1} parent=0 // pred_fallthru
    _
  %v21 = vld [vmem:[%s1] sm:$0xff]
  %v22 = vld [vmem:[%s1 + $0x8] sm:$0xff]
  %v23 = vld [vmem:[%s1 + $0x10] sm:$0x1]
  %v24 = vld [vmem:[%s1 + $0x18] sm:$0x1]
  %v25 = vld [vmem:[%s4] sm:$0xff]
  %v26 = vld [vmem:[%s0] sm:$0xff]
  %v27 = vld [vmem:[%s0 + $0x8] sm:$0xff]
  %28 = vrot.lane.b32.xlu0 %v26, 17
  %v29 = vpop.permute.xlu0 %28
  %30 = vrot.lane.b32.xlu0 %v27, 17
  %v31 = vpop.permute.xlu0 %30
  %v32 = vlaneseq
  %v33 = vand.u32 %v32, 127
  %vm34 = vcmp.lt.s32.totalorder %v33, 17
  %v35 = vsel %vm34, %v29, %v31
  %v36 = vsel %vm34, %v31, %v29
  %v37 = vlaneseq
  %v38 = vshrl.u32 %v37, 7
  %v39 = vsub.s32 0, %v38
  %v40 = vrot.slane %v21, %v39
  %v41 = vlaneseq
  %v42 = vshrl.u32 %v41, 7
  %v43 = vsub.s32 0, %v42
  %v44 = vrot.slane %v22, %v43
  %v45 = vmul.f32 %v36, %v40
  %v46 = vmul.f32 %v35, %v44
  %47 = vrot.lane.b32.xlu0 %v26, 16
  %v48 = vpop.permute.xlu0 %47
  %49 = vrot.lane.b32.xlu0 %v27, 16
  %v50 = vpop.permute.xlu0 %49
  %vm51 = vcmp.lt.s32.totalorder %v33, 16
  %v52 = vsel %vm51, %v48, %v50
  %v53 = vsel %vm51, %v50, %v48
  %v54 = vlaneseq
  %v55 = vshrl.u32 %v54, 7
  %v56 = vsub.s32 1, %v55
  %v57 = vrot.slane %v21, %v56
  %v58 = vlaneseq
  %v59 = vshrl.u32 %v58, 7
  %v60 = vsub.s32 1, %v59
  %v61 = vrot.slane %v22, %v60
  %v62 = vmul.f32 %v53, %v57
  %v63 = vmul.f32 %v52, %v61
  %64 = vrot.lane.b32.xlu0 %v26, 15
  %v65 = vpop.permute.xlu0 %64
  %66 = vrot.lane.b32.xlu0 %v27, 15
  %v67 = vpop.permute.xlu0 %66
  %vm68 = vcmp.lt.s32.totalorder %v33, 15
  %v69 = vsel %vm68, %v65, %v67
  %v70 = vsel %vm68, %v67, %v65
  %v71 = vlaneseq
  %v72 = vshrl.u32 %v71, 7
  %v73 = vsub.s32 2, %v72
  %v74 = vrot.slane %v21, %v73
  %v75 = vlaneseq
  %v76 = vshrl.u32 %v75, 7
  %v77 = vsub.s32 2, %v76
  %v78 = vrot.slane %v22, %v77
  %v79 = vmul.f32 %v70, %v74
  %v80 = vmul.f32 %v69, %v78
  %81 = vrot.lane.b32.xlu0 %v26, 1
  %v82 = vpop.permute.xlu0 %81
  %83 = vrot.lane.b32.xlu0 %v27, 1
  %v84 = vpop.permute.xlu0 %83
  %vm85 = vcmp.lt.s32.totalorder %v33, 1
  %v86 = vsel %vm85, %v82, %v84
  %v87 = vsel %vm85, %v84, %v82
  %v88 = vlaneseq
  %v89 = vshrl.u32 %v88, 7
  %v90 = vsub.s32 3, %v89
  %v91 = vrot.slane %v21, %v90
  %v92 = vlaneseq
  %v93 = vshrl.u32 %v92, 7
  %v94 = vsub.s32 3, %v93
  %v95 = vrot.slane %v22, %v94
  %v96 = vmul.f32 %v87, %v91
  %v97 = vmul.f32 %v86, %v95
  %v98 = vlaneseq
  %v99 = vshrl.u32 %v98, 7
  %v100 = vsub.s32 4, %v99
  %v101 = vrot.slane %v21, %v100
  %v102 = vlaneseq
  %v103 = vshrl.u32 %v102, 7
  %v104 = vsub.s32 4, %v103
  %v105 = vrot.slane %v22, %v104
  %v106 = vmul.f32 %v26, %v101
  %v107 = vmul.f32 %v27, %v105
  %108 = vrot.lane.b32.xlu0 %v26, 127
  %v109 = vpop.permute.xlu0 %108
  %110 = vrot.lane.b32.xlu0 %v27, 127
  %v111 = vpop.permute.xlu0 %110
  %vm112 = vcmp.lt.s32.totalorder %v33, 127
  %v113 = vsel %vm112, %v109, %v111
  %v114 = vsel %vm112, %v111, %v109
  %v115 = vlaneseq
  %v116 = vshrl.u32 %v115, 7
  %v117 = vsub.s32 5, %v116
  %v118 = vrot.slane %v21, %v117
  %v119 = vlaneseq
  %v120 = vshrl.u32 %v119, 7
  %v121 = vsub.s32 5, %v120
  %v122 = vrot.slane %v22, %v121
  %v123 = vmul.f32 %v113, %v118
  %v124 = vmul.f32 %v114, %v122
  %125 = vrot.lane.b32.xlu0 %v26, 113
  %v126 = vpop.permute.xlu0 %125
  %127 = vrot.lane.b32.xlu0 %v27, 113
  %v128 = vpop.permute.xlu0 %127
  %vm129 = vcmp.lt.s32.totalorder %v33, 113
  %v130 = vsel %vm129, %v126, %v128
  %v131 = vsel %vm129, %v128, %v126
  %v132 = vlaneseq
  %v133 = vshrl.u32 %v132, 7
  %v134 = vsub.s32 6, %v133
  %v135 = vrot.slane %v21, %v134
  %v136 = vlaneseq
  %v137 = vshrl.u32 %v136, 7
  %v138 = vsub.s32 6, %v137
  %v139 = vrot.slane %v22, %v138
  %v140 = vmul.f32 %v130, %v135
  %v141 = vmul.f32 %v131, %v139
  %142 = vrot.lane.b32.xlu0 %v26, 112
  %v143 = vpop.permute.xlu0 %142
  %144 = vrot.lane.b32.xlu0 %v27, 112
  %v145 = vpop.permute.xlu0 %144
  %vm146 = vcmp.lt.s32.totalorder %v33, 112
  %v147 = vsel %vm146, %v143, %v145
  %v148 = vsel %vm146, %v145, %v143
  %v149 = vlaneseq
  %v150 = vshrl.u32 %v149, 7
  %v151 = vsub.s32 7, %v150
  %v152 = vrot.slane %v21, %v151
  %v153 = vlaneseq
  %v154 = vshrl.u32 %v153, 7
  %v155 = vsub.s32 7, %v154
  %v156 = vrot.slane %v22, %v155
  %v157 = vmul.f32 %v147, %v152
  %v158 = vmul.f32 %v148, %v156
  %159 = vrot.lane.b32.xlu0 %v26, 111
  %v160 = vpop.permute.xlu0 %159
  %161 = vrot.lane.b32.xlu0 %v27, 111
  %v162 = vpop.permute.xlu0 %161
  %vm163 = vcmp.lt.s32.totalorder %v33, 111
  %v164 = vsel %vm163, %v160, %v162
  %v165 = vsel %vm163, %v162, %v160
  %v166 = vlaneseq
  %v167 = vshrl.u32 %v166, 7
  %v168 = vsub.s32 0, %v167
  %v169 = vrot.slane %v23, %v168
  %v170 = vlaneseq
  %v171 = vshrl.u32 %v170, 7
  %v172 = vsub.s32 0, %v171
  %v173 = vrot.slane %v24, %v172
  %v174 = vmul.f32 %v164, %v169
  %v175 = vmul.f32 %v165, %v173
  %v176 = vpack.c.bf16 %v62, %v45
  %v177 = vpack.c.bf16 %v63, %v46
  %v178 = vpack.c.bf16 %v96, %v79
  %v179 = vpack.c.bf16 %v97, %v80
  %v180 = vpack.c.bf16 %v123, %v106
  %v181 = vpack.c.bf16 %v124, %v107
  %v182 = vpack.c.bf16 %v157, %v140
  %v183 = vpack.c.bf16 %v158, %v141
  %v184 = vpack.c.bf16 %v174, %v174
  %v185 = vpack.c.bf16 %v175, %v175
  %v186 = vld [vmem:[%s2] sm:$0xf]
  %vm187 = vcmask 588800
  %v189 = vsel %vm187, %v186, 0
  %vm191 = vcmask 1043456
  %v193 = vsel %vm191, %v184, 0
  %v196 = vsel %vm191, %v185, 0
  %198 = vmatprep.subr.bf16.mxu0 0
  %199 = vmatpush1.bf16.msra.mxu0 0
  %200 = vmatprep.subr.bf16.mxu0 0
  %201 = vmatpush1.bf16.msra.mxu0 0
  %202 = vmatprep.subr.bf16.mxu0 0
  %203 = vmatpush1.bf16.msra.mxu0 0
  %204 = vmatprep.subr.bf16.mxu0 %v196
  %205 = vmatpush1.bf16.msra.mxu0 %v193
  %206 = vmatprep.subr.bf16.mxu0 %v183
  %207 = vmatpush1.bf16.msra.mxu0 %v182
  %208 = vmatprep.subr.bf16.mxu0 %v181
  %209 = vmatpush1.bf16.msra.mxu0 %v180
  %210 = vmatprep.subr.bf16.mxu0 %v179
  %211 = vmatpush1.bf16.msra.mxu0 %v178
  %212 = vmatprep.subr.bf16.mxu0 %v177
  %213 = vmatpush1.bf16.msra.mxu0 %v176
  %214 = vmatprep.subr.bf16.mxu0 0
  %215 = vmatpush2.bf16.msra.mxu0 0
  %216 = vmatprep.subr.bf16.mxu0 0
  %217 = vmatpush2.bf16.msra.mxu0 0
  %218 = vmatprep.subr.bf16.mxu0 0
  %219 = vmatpush2.bf16.msra.mxu0 0
  %220 = vmatprep.subr.bf16.mxu0 0
  %221 = vmatpush2.bf16.msra.mxu0 0
  %222 = vmatprep.subr.bf16.mxu0 0
  %223 = vmatpush2.bf16.msra.mxu0 0
  %224 = vmatprep.subr.bf16.mxu0 0
  %225 = vmatpush2.bf16.msra.mxu0 0
  %226 = vmatprep.subr.bf16.mxu0 0
  %227 = vmatpush2.bf16.msra.mxu0 0
  %228 = vmatprep.subr.bf16.mxu0 0
  %229 = vmatpush2.bf16.msra.mxu0 0
  %230 = vmatprep.mubr.bf16.mxu0 0
  %231 = vmatmul.mubr.bf16.gmra.mxu0 %v189
  %v232 = vpop.f32.mrf.mxu0
  %v233 = vadd.f32 0.0, %v232
  %v234 = vpop.f32.mrf.mxu0
  %v235 = vadd.f32 0.0, %v234
  %v236 = vpop.f32.mrf.mxu0
  %v237 = vpop.f32.mrf.mxu0
  %238 = vdwg.mxu0
  %v239 = vadd.f32 %v233, %v235
  %240 = vadd.xlane.f32.xlu0 %v239
  %v241 = vpop.xlane.xlu0 %240
  %v242 = vadd.f32 %v241, 0.0
  %v243 = vmul.f32 %v233, %v233
  %v244 = vmul.f32 %v235, %v235
  %v245 = vadd.f32 %v243, %v244
  %246 = vadd.xlane.f32.xlu0 %v245
  %v247 = vpop.xlane.xlu0 %246
  %v248 = vadd.f32 %v247, 0.0
  %s249 = scalar_lea.vmem %s0, 16
  %v250 = vld [vmem:[%s249] sm:$0xff]
  %v251 = vld [vmem:[%s249 + $0x8] sm:$0xff]
  %252 = vrot.lane.b32.xlu0 %v250, 17
  %v253 = vpop.permute.xlu0 %252
  %254 = vrot.lane.b32.xlu0 %v251, 17
  %v255 = vpop.permute.xlu0 %254
  %v256 = vsel %vm34, %v253, %v255
  %v257 = vsel %vm34, %v255, %v253
  %v258 = vmul.f32 %v257, %v40
  %v259 = vmul.f32 %v256, %v44
  %260 = vrot.lane.b32.xlu0 %v250, 16
  %v261 = vpop.permute.xlu0 %260
  %262 = vrot.lane.b32.xlu0 %v251, 16
  %v263 = vpop.permute.xlu0 %262
  %v264 = vsel %vm51, %v261, %v263
  %v265 = vsel %vm51, %v263, %v261
  %v266 = vmul.f32 %v265, %v57
  %v267 = vmul.f32 %v264, %v61
  %268 = vrot.lane.b32.xlu0 %v250, 15
  %v269 = vpop.permute.xlu0 %268
  %270 = vrot.lane.b32.xlu0 %v251, 15
  %v271 = vpop.permute.xlu0 %270
  %v272 = vsel %vm68, %v269, %v271
  %v273 = vsel %vm68, %v271, %v269
  %v274 = vmul.f32 %v273, %v74
  %v275 = vmul.f32 %v272, %v78
  %276 = vrot.lane.b32.xlu0 %v250, 1
  %v277 = vpop.permute.xlu0 %276
  %278 = vrot.lane.b32.xlu0 %v251, 1
  %v279 = vpop.permute.xlu0 %278
  %v280 = vsel %vm85, %v277, %v279
  %v281 = vsel %vm85, %v279, %v277
  %v282 = vmul.f32 %v281, %v91
  %v283 = vmul.f32 %v280, %v95
  %v284 = vmul.f32 %v250, %v101
  %v285 = vmul.f32 %v251, %v105
  %286 = vrot.lane.b32.xlu0 %v250, 127
  %v287 = vpop.permute.xlu0 %286
  %288 = vrot.lane.b32.xlu0 %v251, 127
  %v289 = vpop.permute.xlu0 %288
  %v290 = vsel %vm112, %v287, %v289
  %v291 = vsel %vm112, %v289, %v287
  %v292 = vmul.f32 %v290, %v118
  %v293 = vmul.f32 %v291, %v122
  %294 = vrot.lane.b32.xlu0 %v250, 113
  %v295 = vpop.permute.xlu0 %294
  %296 = vrot.lane.b32.xlu0 %v251, 113
  %v297 = vpop.permute.xlu0 %296
  %v298 = vsel %vm129, %v295, %v297
  %v299 = vsel %vm129, %v297, %v295
  %v300 = vmul.f32 %v298, %v135
  %v301 = vmul.f32 %v299, %v139
  %302 = vrot.lane.b32.xlu0 %v250, 112
  %v303 = vpop.permute.xlu0 %302
  %304 = vrot.lane.b32.xlu0 %v251, 112
  %v305 = vpop.permute.xlu0 %304
  %v306 = vsel %vm146, %v303, %v305
  %v307 = vsel %vm146, %v305, %v303
  %v308 = vmul.f32 %v306, %v152
  %v309 = vmul.f32 %v307, %v156
  %310 = vrot.lane.b32.xlu0 %v250, 111
  %v311 = vpop.permute.xlu0 %310
  %312 = vrot.lane.b32.xlu0 %v251, 111
  %v313 = vpop.permute.xlu0 %312
  %v314 = vsel %vm163, %v311, %v313
  %v315 = vsel %vm163, %v313, %v311
  %v316 = vmul.f32 %v314, %v169
  %v317 = vmul.f32 %v315, %v173
  %v318 = vpack.c.bf16 %v266, %v258
  %v319 = vpack.c.bf16 %v267, %v259
  %v320 = vpack.c.bf16 %v282, %v274
  %v321 = vpack.c.bf16 %v283, %v275
  %v322 = vpack.c.bf16 %v292, %v284
  %v323 = vpack.c.bf16 %v293, %v285
  %v324 = vpack.c.bf16 %v308, %v300
  %v325 = vpack.c.bf16 %v309, %v301
  %v326 = vpack.c.bf16 %v316, %v316
  %v327 = vpack.c.bf16 %v317, %v317
  %v329 = vsel %vm191, %v326, 0
  %v332 = vsel %vm191, %v327, 0
  %334 = vmatprep.subr.bf16.mxu0 0
  %335 = vmatpush1.bf16.msra.mxu0 0
  %336 = vmatprep.subr.bf16.mxu0 0
  %337 = vmatpush1.bf16.msra.mxu0 0
  %338 = vmatprep.subr.bf16.mxu0 0
  %339 = vmatpush1.bf16.msra.mxu0 0
  %340 = vmatprep.subr.bf16.mxu0 %v332
  %341 = vmatpush1.bf16.msra.mxu0 %v329
  %342 = vmatprep.subr.bf16.mxu0 %v325
  %343 = vmatpush1.bf16.msra.mxu0 %v324
  %344 = vmatprep.subr.bf16.mxu0 %v323
  %345 = vmatpush1.bf16.msra.mxu0 %v322
  %346 = vmatprep.subr.bf16.mxu0 %v321
  %347 = vmatpush1.bf16.msra.mxu0 %v320
  %348 = vmatprep.subr.bf16.mxu0 %v319
  %349 = vmatpush1.bf16.msra.mxu0 %v318
  %350 = vmatprep.subr.bf16.mxu0 0
  %351 = vmatpush2.bf16.msra.mxu0 0
  %352 = vmatprep.subr.bf16.mxu0 0
  %353 = vmatpush2.bf16.msra.mxu0 0
  %354 = vmatprep.subr.bf16.mxu0 0
  %355 = vmatpush2.bf16.msra.mxu0 0
  %356 = vmatprep.subr.bf16.mxu0 0
  %357 = vmatpush2.bf16.msra.mxu0 0
  %358 = vmatprep.subr.bf16.mxu0 0
  %359 = vmatpush2.bf16.msra.mxu0 0
  %360 = vmatprep.subr.bf16.mxu0 0
  %361 = vmatpush2.bf16.msra.mxu0 0
  %362 = vmatprep.subr.bf16.mxu0 0
  %363 = vmatpush2.bf16.msra.mxu0 0
  %364 = vmatprep.subr.bf16.mxu0 0
  %365 = vmatpush2.bf16.msra.mxu0 0
  %366 = vmatprep.mubr.bf16.mxu0 0
  %367 = vmatmul.mubr.bf16.gmra.mxu0 %v189
  %v368 = vpop.f32.mrf.mxu0
  %v369 = vadd.f32 0.0, %v368
  %v370 = vpop.f32.mrf.mxu0
  %v371 = vadd.f32 0.0, %v370
  %v372 = vpop.f32.mrf.mxu0
  %v373 = vpop.f32.mrf.mxu0
  %374 = vdwg.mxu0
  %v375 = vadd.f32 %v369, %v371
  %376 = vadd.xlane.f32.xlu0 %v375
  %v377 = vpop.xlane.xlu0 %376
  %v378 = vadd.f32 %v242, %v377
  %v379 = vmul.f32 %v369, %v369
  %v380 = vmul.f32 %v371, %v371
  %v381 = vadd.f32 %v379, %v380
  %382 = vadd.xlane.f32.xlu0 %v381
  %v383 = vpop.xlane.xlu0 %382
  %v384 = vadd.f32 %v248, %v383
  %v385 = vmul.f32 %v378, 0.001953125
  %v386 = vmul.f32 %v384, 0.001953125
  %v387 = vmul.f32 %v385, %v385
  %v388 = vsub.f32 %v386, %v387
  %v389 = vadd.f32 %v388, 1e-05
  %v390 = vrsqrt.pop %v389
  %v391 = vmul.f32 %v25, %v390
  %v392 = vmul.f32 %v385, %v391
  %394 = vrot.lane.b32.xlu0 %v392, 1
  %v395 = vpop.permute.xlu0 %394
  %v397 = vsub.f32 %v25, %v395
  %399 = vset.pattern.permute.xlu0 0
  %400 = vperm.xlu0 %399, %v391
  %v401 = vpop.permute.xlu0 %400
  %v403 = vmul.f32 %v233, %v401
  %v404 = vmul.f32 %v235, %v401
  %406 = vset.pattern.permute.xlu0 1
  %407 = vperm.xlu0 %406, %v397
  %v408 = vpop.permute.xlu0 %407
  %v410 = vadd.f32 %v403, %v408
  %v411 = vadd.f32 %v404, %v408
  %v412 = vmax.f32 %v410, 0.0
  %v413 = vmax.f32 %v411, 0.0
  %414 = vrot.lane.b32.xlu0 %v412, 17
  %v415 = vpop.permute.xlu0 %414
  %416 = vrot.lane.b32.xlu0 %v413, 17
  %v417 = vpop.permute.xlu0 %416
  %v418 = vsel %vm34, %v415, %v417
  %v419 = vsel %vm34, %v417, %v415
  %v420 = vmul.f32 %v419, %v40
  %v421 = vmul.f32 %v418, %v44
  %422 = vrot.lane.b32.xlu0 %v412, 16
  %v423 = vpop.permute.xlu0 %422
  %424 = vrot.lane.b32.xlu0 %v413, 16
  %v425 = vpop.permute.xlu0 %424
  %v426 = vsel %vm51, %v423, %v425
  %v427 = vsel %vm51, %v425, %v423
  %v428 = vmul.f32 %v427, %v57
  %v429 = vmul.f32 %v426, %v61
  %430 = vrot.lane.b32.xlu0 %v412, 15
  %v431 = vpop.permute.xlu0 %430
  %432 = vrot.lane.b32.xlu0 %v413, 15
  %v433 = vpop.permute.xlu0 %432
  %v434 = vsel %vm68, %v431, %v433
  %v435 = vsel %vm68, %v433, %v431
  %v436 = vmul.f32 %v435, %v74
  %v437 = vmul.f32 %v434, %v78
  %438 = vrot.lane.b32.xlu0 %v412, 1
  %v439 = vpop.permute.xlu0 %438
  %440 = vrot.lane.b32.xlu0 %v413, 1
  %v441 = vpop.permute.xlu0 %440
  %v442 = vsel %vm85, %v439, %v441
  %v443 = vsel %vm85, %v441, %v439
  %v444 = vmul.f32 %v443, %v91
  %v445 = vmul.f32 %v442, %v95
  %v446 = vmul.f32 %v412, %v101
  %v447 = vmul.f32 %v413, %v105
  %448 = vrot.lane.b32.xlu0 %v412, 127
  %v449 = vpop.permute.xlu0 %448
  %450 = vrot.lane.b32.xlu0 %v413, 127
  %v451 = vpop.permute.xlu0 %450
  %v452 = vsel %vm112, %v449, %v451
  %v453 = vsel %vm112, %v451, %v449
  %v454 = vmul.f32 %v452, %v118
  %v455 = vmul.f32 %v453, %v122
  %456 = vrot.lane.b32.xlu0 %v412, 113
  %v457 = vpop.permute.xlu0 %456
  %458 = vrot.lane.b32.xlu0 %v413, 113
  %v459 = vpop.permute.xlu0 %458
  %v460 = vsel %vm129, %v457, %v459
  %v461 = vsel %vm129, %v459, %v457
  %v462 = vmul.f32 %v460, %v135
  %v463 = vmul.f32 %v461, %v139
  %464 = vrot.lane.b32.xlu0 %v412, 112
  %v465 = vpop.permute.xlu0 %464
  %466 = vrot.lane.b32.xlu0 %v413, 112
  %v467 = vpop.permute.xlu0 %466
  %v468 = vsel %vm146, %v465, %v467
  %v469 = vsel %vm146, %v467, %v465
  %v470 = vmul.f32 %v468, %v152
  %v471 = vmul.f32 %v469, %v156
  %472 = vrot.lane.b32.xlu0 %v412, 111
  %v473 = vpop.permute.xlu0 %472
  %474 = vrot.lane.b32.xlu0 %v413, 111
  %v475 = vpop.permute.xlu0 %474
  %v476 = vsel %vm163, %v473, %v475
  %v477 = vsel %vm163, %v475, %v473
  %v478 = vmul.f32 %v476, %v169
  %v479 = vmul.f32 %v477, %v173
  %v480 = vpack.c.bf16 %v428, %v420
  %v481 = vpack.c.bf16 %v429, %v421
  %v482 = vpack.c.bf16 %v444, %v436
  %v483 = vpack.c.bf16 %v445, %v437
  %v484 = vpack.c.bf16 %v454, %v446
  %v485 = vpack.c.bf16 %v455, %v447
  %v486 = vpack.c.bf16 %v470, %v462
  %v487 = vpack.c.bf16 %v471, %v463
  %v488 = vpack.c.bf16 %v478, %v478
  %v489 = vpack.c.bf16 %v479, %v479
  %v490 = vld [vmem:[%s3] sm:$0xf]
  %v492 = vsel %vm187, %v490, 0
  %v495 = vsel %vm191, %v488, 0
  %v498 = vsel %vm191, %v489, 0
  %500 = vmatprep.subr.bf16.mxu0 0
  %501 = vmatpush1.bf16.msra.mxu0 0
  %502 = vmatprep.subr.bf16.mxu0 0
  %503 = vmatpush1.bf16.msra.mxu0 0
  %504 = vmatprep.subr.bf16.mxu0 0
  %505 = vmatpush1.bf16.msra.mxu0 0
  %506 = vmatprep.subr.bf16.mxu0 %v498
  %507 = vmatpush1.bf16.msra.mxu0 %v495
  %508 = vmatprep.subr.bf16.mxu0 %v487
  %509 = vmatpush1.bf16.msra.mxu0 %v486
  %510 = vmatprep.subr.bf16.mxu0 %v485
  %511 = vmatpush1.bf16.msra.mxu0 %v484
  %512 = vmatprep.subr.bf16.mxu0 %v483
  %513 = vmatpush1.bf16.msra.mxu0 %v482
  %514 = vmatprep.subr.bf16.mxu0 %v481
  %515 = vmatpush1.bf16.msra.mxu0 %v480
  %516 = vmatprep.subr.bf16.mxu0 0
  %517 = vmatpush2.bf16.msra.mxu0 0
  %518 = vmatprep.subr.bf16.mxu0 0
  %519 = vmatpush2.bf16.msra.mxu0 0
  %520 = vmatprep.subr.bf16.mxu0 0
  %521 = vmatpush2.bf16.msra.mxu0 0
  %522 = vmatprep.subr.bf16.mxu0 0
  %523 = vmatpush2.bf16.msra.mxu0 0
  %524 = vmatprep.subr.bf16.mxu0 0
  %525 = vmatpush2.bf16.msra.mxu0 0
  %526 = vmatprep.subr.bf16.mxu0 0
  %527 = vmatpush2.bf16.msra.mxu0 0
  %528 = vmatprep.subr.bf16.mxu0 0
  %529 = vmatpush2.bf16.msra.mxu0 0
  %530 = vmatprep.subr.bf16.mxu0 0
  %531 = vmatpush2.bf16.msra.mxu0 0
  %532 = vmatprep.mubr.bf16.mxu0 0
  %533 = vmatmul.mubr.bf16.gmra.mxu0 %v492
  %v534 = vpop.f32.mrf.mxu0
  %v535 = vadd.f32 0.0, %v534
  %v536 = vpop.f32.mrf.mxu0
  %v537 = vadd.f32 0.0, %v536
  %v538 = vpop.f32.mrf.mxu0
  %v539 = vpop.f32.mrf.mxu0
  %540 = vdwg.mxu0
  %v541 = vadd.f32 %v535, %v537
  %542 = vadd.xlane.f32.xlu0 %v541
  %v543 = vpop.xlane.xlu0 %542
  %v544 = vadd.f32 %v543, 0.0
  %v545 = vmul.f32 %v535, %v535
  %v546 = vmul.f32 %v537, %v537
  %v547 = vadd.f32 %v545, %v546
  %548 = vadd.xlane.f32.xlu0 %v547
  %v549 = vpop.xlane.xlu0 %548
  %v550 = vadd.f32 %v549, 0.0
  %v551 = vmul.f32 %v369, %v401
  %v552 = vmul.f32 %v371, %v401
  %v553 = vadd.f32 %v551, %v408
  %v554 = vadd.f32 %v552, %v408
  %v555 = vmax.f32 %v553, 0.0
  %v556 = vmax.f32 %v554, 0.0
  %557 = vrot.lane.b32.xlu0 %v555, 17
  %v558 = vpop.permute.xlu0 %557
  %559 = vrot.lane.b32.xlu0 %v556, 17
  %v560 = vpop.permute.xlu0 %559
  %v561 = vsel %vm34, %v558, %v560
  %v562 = vsel %vm34, %v560, %v558
  %v563 = vmul.f32 %v562, %v40
  %v564 = vmul.f32 %v561, %v44
  %565 = vrot.lane.b32.xlu0 %v555, 16
  %v566 = vpop.permute.xlu0 %565
  %567 = vrot.lane.b32.xlu0 %v556, 16
  %v568 = vpop.permute.xlu0 %567
  %v569 = vsel %vm51, %v566, %v568
  %v570 = vsel %vm51, %v568, %v566
  %v571 = vmul.f32 %v570, %v57
  %v572 = vmul.f32 %v569, %v61
  %573 = vrot.lane.b32.xlu0 %v555, 15
  %v574 = vpop.permute.xlu0 %573
  %575 = vrot.lane.b32.xlu0 %v556, 15
  %v576 = vpop.permute.xlu0 %575
  %v577 = vsel %vm68, %v574, %v576
  %v578 = vsel %vm68, %v576, %v574
  %v579 = vmul.f32 %v578, %v74
  %v580 = vmul.f32 %v577, %v78
  %581 = vrot.lane.b32.xlu0 %v555, 1
  %v582 = vpop.permute.xlu0 %581
  %583 = vrot.lane.b32.xlu0 %v556, 1
  %v584 = vpop.permute.xlu0 %583
  %v585 = vsel %vm85, %v582, %v584
  %v586 = vsel %vm85, %v584, %v582
  %v587 = vmul.f32 %v586, %v91
  %v588 = vmul.f32 %v585, %v95
  %v589 = vmul.f32 %v555, %v101
  %v590 = vmul.f32 %v556, %v105
  %591 = vrot.lane.b32.xlu0 %v555, 127
  %v592 = vpop.permute.xlu0 %591
  %593 = vrot.lane.b32.xlu0 %v556, 127
  %v594 = vpop.permute.xlu0 %593
  %v595 = vsel %vm112, %v592, %v594
  %v596 = vsel %vm112, %v594, %v592
  %v597 = vmul.f32 %v595, %v118
  %v598 = vmul.f32 %v596, %v122
  %599 = vrot.lane.b32.xlu0 %v555, 113
  %v600 = vpop.permute.xlu0 %599
  %601 = vrot.lane.b32.xlu0 %v556, 113
  %v602 = vpop.permute.xlu0 %601
  %v603 = vsel %vm129, %v600, %v602
  %v604 = vsel %vm129, %v602, %v600
  %v605 = vmul.f32 %v603, %v135
  %v606 = vmul.f32 %v604, %v139
  %607 = vrot.lane.b32.xlu0 %v555, 112
  %v608 = vpop.permute.xlu0 %607
  %609 = vrot.lane.b32.xlu0 %v556, 112
  %v610 = vpop.permute.xlu0 %609
  %v611 = vsel %vm146, %v608, %v610
  %v612 = vsel %vm146, %v610, %v608
  %v613 = vmul.f32 %v611, %v152
  %v614 = vmul.f32 %v612, %v156
  %615 = vrot.lane.b32.xlu0 %v555, 111
  %v616 = vpop.permute.xlu0 %615
  %617 = vrot.lane.b32.xlu0 %v556, 111
  %v618 = vpop.permute.xlu0 %617
  %v619 = vsel %vm163, %v616, %v618
  %v620 = vsel %vm163, %v618, %v616
  %v621 = vmul.f32 %v619, %v169
  %v622 = vmul.f32 %v620, %v173
  %v623 = vpack.c.bf16 %v571, %v563
  %v624 = vpack.c.bf16 %v572, %v564
  %v625 = vpack.c.bf16 %v587, %v579
  %v626 = vpack.c.bf16 %v588, %v580
  %v627 = vpack.c.bf16 %v597, %v589
  %v628 = vpack.c.bf16 %v598, %v590
  %v629 = vpack.c.bf16 %v613, %v605
  %v630 = vpack.c.bf16 %v614, %v606
  %v631 = vpack.c.bf16 %v621, %v621
  %v632 = vpack.c.bf16 %v622, %v622
  %v634 = vsel %vm191, %v631, 0
  %v637 = vsel %vm191, %v632, 0
  %639 = vmatprep.subr.bf16.mxu0 0
  %640 = vmatpush1.bf16.msra.mxu0 0
  %641 = vmatprep.subr.bf16.mxu0 0
  %642 = vmatpush1.bf16.msra.mxu0 0
  %643 = vmatprep.subr.bf16.mxu0 0
  %644 = vmatpush1.bf16.msra.mxu0 0
  %645 = vmatprep.subr.bf16.mxu0 %v637
  %646 = vmatpush1.bf16.msra.mxu0 %v634
  %647 = vmatprep.subr.bf16.mxu0 %v630
  %648 = vmatpush1.bf16.msra.mxu0 %v629
  %649 = vmatprep.subr.bf16.mxu0 %v628
  %650 = vmatpush1.bf16.msra.mxu0 %v627
  %651 = vmatprep.subr.bf16.mxu0 %v626
  %652 = vmatpush1.bf16.msra.mxu0 %v625
  %653 = vmatprep.subr.bf16.mxu0 %v624
  %654 = vmatpush1.bf16.msra.mxu0 %v623
  %655 = vmatprep.subr.bf16.mxu0 0
  %656 = vmatpush2.bf16.msra.mxu0 0
  %657 = vmatprep.subr.bf16.mxu0 0
  %658 = vmatpush2.bf16.msra.mxu0 0
  %659 = vmatprep.subr.bf16.mxu0 0
  %660 = vmatpush2.bf16.msra.mxu0 0
  %661 = vmatprep.subr.bf16.mxu0 0
  %662 = vmatpush2.bf16.msra.mxu0 0
  %663 = vmatprep.subr.bf16.mxu0 0
  %664 = vmatpush2.bf16.msra.mxu0 0
  %665 = vmatprep.subr.bf16.mxu0 0
  %666 = vmatpush2.bf16.msra.mxu0 0
  %667 = vmatprep.subr.bf16.mxu0 0
  %668 = vmatpush2.bf16.msra.mxu0 0
  %669 = vmatprep.subr.bf16.mxu0 0
  %670 = vmatpush2.bf16.msra.mxu0 0
  %671 = vmatprep.mubr.bf16.mxu0 0
  %672 = vmatmul.mubr.bf16.gmra.mxu0 %v492
  %v673 = vpop.f32.mrf.mxu0
  %v674 = vadd.f32 0.0, %v673
  %v675 = vpop.f32.mrf.mxu0
  %v676 = vadd.f32 0.0, %v675
  %v677 = vpop.f32.mrf.mxu0
  %v678 = vpop.f32.mrf.mxu0
  %679 = vdwg.mxu0
  %v680 = vadd.f32 %v674, %v676
  %681 = vadd.xlane.f32.xlu0 %v680
  %v682 = vpop.xlane.xlu0 %681
  %v683 = vadd.f32 %v544, %v682
  %v684 = vmul.f32 %v674, %v674
  %v685 = vmul.f32 %v676, %v676
  %v686 = vadd.f32 %v684, %v685
  %687 = vadd.xlane.f32.xlu0 %v686
  %v688 = vpop.xlane.xlu0 %687
  %v689 = vadd.f32 %v550, %v688
  %v690 = vmul.f32 %v683, 0.001953125
  %v691 = vmul.f32 %v689, 0.001953125
  %v692 = vmul.f32 %v690, %v690
  %v693 = vsub.f32 %v691, %v692
  %v694 = vadd.f32 %v693, 1e-05
  %v695 = vrsqrt.pop %v694
  %v696 = vmul.f32 %v25, %v695
  %v697 = vmul.f32 %v690, %v696
  %699 = vrot.lane.b32.xlu0 %v697, 1
  %v700 = vpop.permute.xlu0 %699
  %v702 = vsub.f32 %v25, %v700
  %704 = vset.pattern.permute.xlu0 2
  %705 = vperm.xlu0 %704, %v696
  %v706 = vpop.permute.xlu0 %705
  %v708 = vmul.f32 %v535, %v706
  %v709 = vmul.f32 %v537, %v706
  %711 = vset.pattern.permute.xlu0 3
  %712 = vperm.xlu0 %711, %v702
  %v713 = vpop.permute.xlu0 %712
  %v715 = vadd.f32 %v708, %v713
  %v716 = vadd.f32 %v709, %v713
  %v717 = vmax.f32 %v715, 0.0
  %v718 = vmax.f32 %v716, 0.0
  %719 = vst [vmem:[%s5] sm:$0xff] %v717
  %720 = vst [vmem:[%s5 + $0x8] sm:$0xff] %v718
  %v721 = vmul.f32 %v674, %v706
  %v722 = vmul.f32 %v676, %v706
  %v723 = vadd.f32 %v721, %v713
  %v724 = vadd.f32 %v722, %v713
  %v725 = vmax.f32 %v723, 0.0
  %v726 = vmax.f32 %v724, 0.0
  %s727 = scalar_lea.vmem %s5, 16
  %728 = vst [vmem:[%s727] sm:$0xff] %v725
  %729 = vst [vmem:[%s727 + $0x8] sm:$0xff] %v726
  // Predicated region
  $region22: #{conv_block_forward.1} parent=0 // pred_check
    _
  $region23: #{conv_block_forward.1} parent=0 // pred_check_branch
    %731 = sbr.rel (0) target = $region25
  $region24: #{conv_block_forward.1} parent=0 // pred_region
    _
  $region25: #{conv_block_forward.1} parent=0 // pred_fallthru
    _
  // Predicated region
  $region26: #{conv_block_forward.1} parent=0 // pred_check
    _
  $region27: #{conv_block_forward.1} parent=0 // pred_check_branch
    %733 = sbr.rel (0) target = $region29
  $region28: #{conv_block_forward.1} parent=0 // pred_region
    _
  $region29: #{conv_block_forward.1} parent=0 // pred_fallthru
    _

</llo_original>
